<compile_context>
chip_gen: v6e
topology: v6e:2x2x1
jax: 0.10.0
libtpu: 0.0.40
codegen_flags: <defaults>
</compile_context>

<pallas_src>
import functools

import jax
import jax.numpy as jnp
from jax.experimental import pallas as pl
from jax.experimental.pallas import tpu as pltpu

LANE = 128        # lane width (last-dim padding target)
SUBLANE = 8       # f32 sublanes (batch padding target)
MAX_TILE_M = 512  # batch rows per grid step (amortizes the weight stream)


def _round_up(n, m):
    return (n + m - 1) // m * m


def _fused_forward_kernel(*refs, n_layers, n_enc, rec_valid_dim):
    """Fully fused MLP autoencoder forward on one batch tile.

    refs layout: (x, w_0..w_{L-1}, b_0..b_{L-1}, z_out, rec_out)
      x:   (tile_m, pad_in0)        f32, zero-padded lanes
      w_l: (pad_in_l, pad_out_l)    bf16, stored as (in, out) == PyTorch W.T
      b_l: (1, pad_out_l)           f32, zero-padded
      z:   (tile_m, pad_latent)     f32
      rec: (tile_m, pad_out_last)   f32

    Zero padding is self-consistent: padded lanes stay 0 through every
    Linear+ReLU; rec's padded lanes are explicitly masked back to 0 (a bare
    sigmoid would leave 0.5 there). Rows >= batch (sublane padding) are not
    meaningful and must be sliced off by consumers.
    """
    x_ref = refs[0]
    w_refs = refs[1:1 + n_layers]
    b_refs = refs[1 + n_layers:1 + 2 * n_layers]
    z_ref = refs[1 + 2 * n_layers]
    rec_ref = refs[2 + 2 * n_layers]

    h = x_ref[...]                                    # f32 activations
    # Static unroll over 4 tiny layers; no spills observed, so no fori_loop.
    for layer in range(n_layers):
        # bf16 x bf16 MXU matmul, f32 accumulation.
        h = jnp.dot(h.astype(jnp.bfloat16), w_refs[layer][...],
                    preferred_element_type=jnp.float32)
        h = jnp.maximum(h + b_refs[layer][...], 0.0)  # bias + ReLU in f32 (VPU)
        if layer == n_enc - 1:
            z_ref[...] = h                            # latent code, lane-dense store

    rec = jax.nn.sigmoid(h)                           # EUP transcendental
    if rec_valid_dim < rec_ref.shape[-1]:
        lane = jax.lax.broadcasted_iota(jnp.int32, rec_ref.shape, 1)
        rec = jnp.where(lane < rec_valid_dim, rec, 0.0)
    rec_ref[...] = rec                                # lane-dense store


def init_layers(key, input_dim, encoding_dims):
    """PyTorch nn.Linear init: U(-1/sqrt(fan_in), 1/sqrt(fan_in)).

    Returns (layers, n_enc); each layer is (w, b) with w as (in, out) == W.T.
    """
    enc = list(zip([input_dim] + encoding_dims[:-1], encoding_dims))
    rev = list(reversed(encoding_dims))
    dec = list(zip(rev, rev[1:] + [input_dim]))
    layers = []
    for fan_in, fan_out in enc + dec:
        key, kw, kb = jax.random.split(key, 3)
        bound = 1.0 / float(fan_in) ** 0.5
        w = jax.random.uniform(kw, (fan_in, fan_out), jnp.float32, -bound, bound)
        b = jax.random.uniform(kb, (fan_out,), jnp.float32, -bound, bound)
        layers.append((w, b))
    return layers, len(enc)


def pack_params(layers):
    """Per-layer padding to (round_up(fan_in,128), round_up(fan_out,128)).

    Weights -> bf16 (halves weight DMA, native MXU path); biases stay f32 so
    all VPU/EUP work remains in the f32 accumulator.
    """
    ws, bs = [], []
    for w, b in layers:
        fi, fo = w.shape
        pi, po = _round_up(fi, LANE), _round_up(fo, LANE)
        wp = jnp.zeros((pi, po), jnp.bfloat16).at[:fi, :fo].set(w.astype(jnp.bfloat16))
        bp = jnp.zeros((1, po), jnp.float32).at[0, :fo].set(b)
        ws.append(wp)
        bs.append(bp)
    return tuple(ws), tuple(bs)


def pad_input(x, pad_in0):
    """One-time ("persistent") padding of the input to (round_up(B), pad_in0)."""
    batch, in_dim = x.shape
    m_pad = _round_up(max(batch, SUBLANE), SUBLANE)
    if m_pad > MAX_TILE_M:
        m_pad = _round_up(m_pad, MAX_TILE_M)
    return jnp.zeros((m_pad, pad_in0), jnp.float32).at[:batch, :in_dim].set(x)


def text_autoencoder_forward(x_pad, ws, bs, *, n_enc, input_dim):
    """Matches TextAutoencoder.forward: returns padded (z, reconstructed).

    The hot path is exactly one pallas_call; consumers slice [:batch, :dim].
    """
    n_layers = len(ws)
    m_pad, pad_in0 = x_pad.shape
    assert pad_in0 == ws[0].shape[0]
    tile_m = min(m_pad, MAX_TILE_M)
    assert m_pad % tile_m == 0
    grid = (m_pad // tile_m,)

    pad_latent = ws[n_enc - 1].shape[1]
    pad_out = ws[-1].shape[1]

    kernel = functools.partial(_fused_forward_kernel, n_layers=n_layers,
                               n_enc=n_enc, rec_valid_dim=input_dim)

    # Batch axis is tiled; weights/biases use constant index_maps so each
    # param block is fetched once and stays VMEM-resident across batch tiles.
    in_specs = [pl.BlockSpec((tile_m, pad_in0), lambda i: (i, 0))]
    in_specs += [pl.BlockSpec(w.shape, lambda i: (0, 0)) for w in ws]
    in_specs += [pl.BlockSpec(b.shape, lambda i: (0, 0)) for b in bs]

    # TODO(synk): at real vocab sizes, add grid axes tiling layer 0's
    # contraction (K) and the last layer's output (N) and set vmem_limit_bytes
    # so double-buffered slabs stay under v7x's 64 MiB VMEM.
    return pl.pallas_call(
        kernel,
        out_shape=(
            jax.ShapeDtypeStruct((m_pad, pad_latent), jnp.float32),
            jax.ShapeDtypeStruct((m_pad, pad_out), jnp.float32),
        ),
        grid=grid,
        in_specs=in_specs,
        out_specs=(
            pl.BlockSpec((tile_m, pad_latent), lambda i: (i, 0)),
            pl.BlockSpec((tile_m, pad_out), lambda i: (i, 0)),
        ),
        compiler_params=pltpu.CompilerParams(
            dimension_semantics=("parallel",)),  # megacore split on v7x
    )(x_pad, *ws, *bs)


def _reference_forward(layers, n_enc, x):
    """Pure-JAX reference (unpadded), mirroring the kernel's bf16-matmul /
    f32-accumulate numerics and the PyTorch layer structure."""
    h = x
    z = None
    for i, (w, b) in enumerate(layers):
        h = jnp.dot(h.astype(jnp.bfloat16), w.astype(jnp.bfloat16),
                    preferred_element_type=jnp.float32) + b
        h = jnp.maximum(h, 0.0)
        if i == n_enc - 1:
            z = h
    return z, jax.nn.sigmoid(h)


if __name__ == "__main__":
    input_dim = 32
    encoding_dims = [16, 8]
    batch = 4
    latent_dim = encoding_dims[-1]

    key = jax.random.PRNGKey(0)
    key, kx = jax.random.split(key)
    x = jax.random.uniform(kx, (batch, input_dim), jnp.float32)  # bag-of-words-ish

    layers, n_enc = init_layers(key, input_dim, encoding_dims)
    ws, bs = pack_params(layers)
    x_pad = pad_input(x, ws[0].shape[0])   # padded once, outside the hot path

    fwd = jax.jit(functools.partial(text_autoencoder_forward,
                                    n_enc=n_enc, input_dim=input_dim))
    z_pad, rec_pad = fwd(x_pad, ws, bs)
    jax.block_until_ready(z_pad)
    jax.block_until_ready(rec_pad)

    # Consumers slice the padded outputs lazily.
    z = z_pad[:batch, :latent_dim]
    reconstructed = rec_pad[:batch, :input_dim]

    z_ref, rec_ref = _reference_forward(layers, n_enc, x)
    assert z.shape == (batch, latent_dim)
    assert reconstructed.shape == (batch, input_dim)
    assert jnp.allclose(z, z_ref, atol=1e-4), "latent mismatch vs reference"
    assert jnp.allclose(reconstructed, rec_ref, atol=1e-4), "reconstruction mismatch"
    # Padded reconstruction lanes are masked to exactly 0 in-kernel.
    assert jnp.all(rec_pad[:batch, input_dim:] == 0.0)

    print("KERNEL_OK")
</pallas_src>

<mosaic_0001>
module attributes {stable_mosaic.version = 11 : i64} {
  func.func @_fused_forward_kernel(%arg0: i32, %arg1: memref<8x128xf32, #tpu.memory_space<vmem>>, %arg2: memref<128x128xbf16, #tpu.memory_space<vmem>>, %arg3: memref<128x128xbf16, #tpu.memory_space<vmem>>, %arg4: memref<128x128xbf16, #tpu.memory_space<vmem>>, %arg5: memref<128x128xbf16, #tpu.memory_space<vmem>>, %arg6: memref<1x128xf32, #tpu.memory_space<vmem>>, %arg7: memref<1x128xf32, #tpu.memory_space<vmem>>, %arg8: memref<1x128xf32, #tpu.memory_space<vmem>>, %arg9: memref<1x128xf32, #tpu.memory_space<vmem>>, %arg10: memref<8x128xf32, #tpu.memory_space<vmem>>, %arg11: memref<8x128xf32, #tpu.memory_space<vmem>>) attributes {dimension_semantics = [#tpu.dimension_semantics<parallel>], iteration_bounds = array<i64: 1>, scalar_prefetch = 0 : i64, scratch_operands = 0 : i64, tpu.core_type = #tpu.core_type<tc>, window_params = [{transform_indices = @transform_0, window_bounds = array<i64: 8, 128>}, {pipeline_mode = #tpu.pipeline_mode<synchronous>, transform_indices = @transform_1, window_bounds = array<i64: 128, 128>}, {pipeline_mode = #tpu.pipeline_mode<synchronous>, transform_indices = @transform_2, window_bounds = array<i64: 128, 128>}, {pipeline_mode = #tpu.pipeline_mode<synchronous>, transform_indices = @transform_3, window_bounds = array<i64: 128, 128>}, {pipeline_mode = #tpu.pipeline_mode<synchronous>, transform_indices = @transform_4, window_bounds = array<i64: 128, 128>}, {pipeline_mode = #tpu.pipeline_mode<synchronous>, transform_indices = @transform_5, window_bounds = array<i64: 1, 128>}, {pipeline_mode = #tpu.pipeline_mode<synchronous>, transform_indices = @transform_6, window_bounds = array<i64: 1, 128>}, {pipeline_mode = #tpu.pipeline_mode<synchronous>, transform_indices = @transform_7, window_bounds = array<i64: 1, 128>}, {pipeline_mode = #tpu.pipeline_mode<synchronous>, transform_indices = @transform_8, window_bounds = array<i64: 1, 128>}, {transform_indices = @transform_9, window_bounds = array<i64: 8, 128>}, {transform_indices = @transform_10, window_bounds = array<i64: 8, 128>}]} {
    %c0 = arith.constant 0 : index
    %c0_0 = arith.constant 0 : index
    %0 = vector.load %arg1[%c0, %c0_0] : memref<8x128xf32, #tpu.memory_space<vmem>>, vector<8x128xf32>
    %1 = arith.truncf %0 : vector<8x128xf32> to vector<8x128xbf16>
    %c0_1 = arith.constant 0 : index
    %c0_2 = arith.constant 0 : index
    %2 = vector.load %arg2[%c0_1, %c0_2] : memref<128x128xbf16, #tpu.memory_space<vmem>>, vector<128x128xbf16>
    %cst = arith.constant dense<0.000000e+00> : vector<8x128xf32>
    %3 = tpu.matmul %1, %2, %cst {dimension_numbers = #tpu.dot_dimension_numbers<[1], [0], [0], [1], [0, 0, 1, 1], [], []>} : vector<8x128xbf16>, vector<128x128xbf16>, vector<8x128xf32> -> vector<8x128xf32>
    %c0_3 = arith.constant 0 : index
    %c0_4 = arith.constant 0 : index
    %4 = vector.load %arg6[%c0_3, %c0_4] : memref<1x128xf32, #tpu.memory_space<vmem>>, vector<1x128xf32>
    %5 = vector.broadcast %4 : vector<1x128xf32> to vector<8x128xf32>
    %6 = arith.addf %3, %5 : vector<8x128xf32>
    %cst_5 = arith.constant 0.000000e+00 : f32
    %7 = vector.broadcast %cst_5 : f32 to vector<8x128xf32>
    %8 = arith.maximumf %6, %7 : vector<8x128xf32>
    %9 = arith.truncf %8 : vector<8x128xf32> to vector<8x128xbf16>
    %c0_6 = arith.constant 0 : index
    %c0_7 = arith.constant 0 : index
    %10 = vector.load %arg3[%c0_6, %c0_7] : memref<128x128xbf16, #tpu.memory_space<vmem>>, vector<128x128xbf16>
    %cst_8 = arith.constant dense<0.000000e+00> : vector<8x128xf32>
    %11 = tpu.matmul %9, %10, %cst_8 {dimension_numbers = #tpu.dot_dimension_numbers<[1], [0], [0], [1], [0, 0, 1, 1], [], []>} : vector<8x128xbf16>, vector<128x128xbf16>, vector<8x128xf32> -> vector<8x128xf32>
    %c0_9 = arith.constant 0 : index
    %c0_10 = arith.constant 0 : index
    %12 = vector.load %arg7[%c0_9, %c0_10] : memref<1x128xf32, #tpu.memory_space<vmem>>, vector<1x128xf32>
    %13 = vector.broadcast %12 : vector<1x128xf32> to vector<8x128xf32>
    %14 = arith.addf %11, %13 : vector<8x128xf32>
    %cst_11 = arith.constant 0.000000e+00 : f32
    %15 = vector.broadcast %cst_11 : f32 to vector<8x128xf32>
    %16 = arith.maximumf %14, %15 : vector<8x128xf32>
    %c0_12 = arith.constant 0 : index
    %c0_13 = arith.constant 0 : index
    %17 = vector.load %arg10[%c0_12, %c0_13] : memref<8x128xf32, #tpu.memory_space<vmem>>, vector<8x128xf32>
    tpu.vector_store %arg10[%c0_12, %c0_13], %16 {strides = array<i32>} : memref<8x128xf32, #tpu.memory_space<vmem>>, vector<8x128xf32>,
    %18 = arith.truncf %16 : vector<8x128xf32> to vector<8x128xbf16>
    %c0_14 = arith.constant 0 : index
    %c0_15 = arith.constant 0 : index
    %19 = vector.load %arg4[%c0_14, %c0_15] : memref<128x128xbf16, #tpu.memory_space<vmem>>, vector<128x128xbf16>
    %cst_16 = arith.constant dense<0.000000e+00> : vector<8x128xf32>
    %20 = tpu.matmul %18, %19, %cst_16 {dimension_numbers = #tpu.dot_dimension_numbers<[1], [0], [0], [1], [0, 0, 1, 1], [], []>} : vector<8x128xbf16>, vector<128x128xbf16>, vector<8x128xf32> -> vector<8x128xf32>
    %c0_17 = arith.constant 0 : index
    %c0_18 = arith.constant 0 : index
    %21 = vector.load %arg8[%c0_17, %c0_18] : memref<1x128xf32, #tpu.memory_space<vmem>>, vector<1x128xf32>
    %22 = vector.broadcast %21 : vector<1x128xf32> to vector<8x128xf32>
    %23 = arith.addf %20, %22 : vector<8x128xf32>
    %cst_19 = arith.constant 0.000000e+00 : f32
    %24 = vector.broadcast %cst_19 : f32 to vector<8x128xf32>
    %25 = arith.maximumf %23, %24 : vector<8x128xf32>
    %26 = arith.truncf %25 : vector<8x128xf32> to vector<8x128xbf16>
    %c0_20 = arith.constant 0 : index
    %c0_21 = arith.constant 0 : index
    %27 = vector.load %arg5[%c0_20, %c0_21] : memref<128x128xbf16, #tpu.memory_space<vmem>>, vector<128x128xbf16>
    %cst_22 = arith.constant dense<0.000000e+00> : vector<8x128xf32>
    %28 = tpu.matmul %26, %27, %cst_22 {dimension_numbers = #tpu.dot_dimension_numbers<[1], [0], [0], [1], [0, 0, 1, 1], [], []>} : vector<8x128xbf16>, vector<128x128xbf16>, vector<8x128xf32> -> vector<8x128xf32>
    %c0_23 = arith.constant 0 : index
    %c0_24 = arith.constant 0 : index
    %29 = vector.load %arg9[%c0_23, %c0_24] : memref<1x128xf32, #tpu.memory_space<vmem>>, vector<1x128xf32>
    %30 = vector.broadcast %29 : vector<1x128xf32> to vector<8x128xf32>
    %31 = arith.addf %28, %30 : vector<8x128xf32>
    %cst_25 = arith.constant 0.000000e+00 : f32
    %32 = vector.broadcast %cst_25 : f32 to vector<8x128xf32>
    %33 = arith.maximumf %31, %32 : vector<8x128xf32>
    %34 = arith.negf %33 : vector<8x128xf32>
    %35 = math.exp %34 : vector<8x128xf32>
    %cst_26 = arith.constant 1.000000e+00 : f32
    %36 = vector.broadcast %cst_26 : f32 to vector<8x128xf32>
    %37 = arith.addf %36, %35 : vector<8x128xf32>
    %38 = arith.divf %36, %37 : vector<8x128xf32>
    %39 = tpu.iota {dimensions = array<i32: 1>} : vector<8x128xi32>
    %c32_i32 = arith.constant 32 : i32
    %40 = vector.broadcast %c32_i32 : i32 to vector<8x128xi32>
    %41 = arith.cmpi slt, %39, %40 : vector<8x128xi32>
    %cst_27 = arith.constant 0.000000e+00 : f32
    %42 = vector.broadcast %cst_27 : f32 to vector<8x128xf32>
    %43 = arith.select %41, %38, %42 : vector<8x128xi1>, vector<8x128xf32>
    %c0_28 = arith.constant 0 : index
    %c0_29 = arith.constant 0 : index
    %44 = vector.load %arg11[%c0_28, %c0_29] : memref<8x128xf32, #tpu.memory_space<vmem>>, vector<8x128xf32>
    tpu.vector_store %arg11[%c0_28, %c0_29], %43 {strides = array<i32>} : memref<8x128xf32, #tpu.memory_space<vmem>>, vector<8x128xf32>,
    return
  }
  func.func @transform_0(%arg0: i32) -> (i32, i32) {
    %c0_i32 = arith.constant 0 : i32
    %c0_i32_0 = arith.constant 0 : i32
    return %arg0, %c0_i32 : i32, i32
  }
  func.func @transform_1(%arg0: i32) -> (i32, i32) {
    %c0_i32 = arith.constant 0 : i32
    %c0_i32_0 = arith.constant 0 : i32
    %c0_i32_1 = arith.constant 0 : i32
    return %c0_i32, %c0_i32_0 : i32, i32
  }
  func.func @transform_2(%arg0: i32) -> (i32, i32) {
    %c0_i32 = arith.constant 0 : i32
    %c0_i32_0 = arith.constant 0 : i32
    %c0_i32_1 = arith.constant 0 : i32
    return %c0_i32, %c0_i32_0 : i32, i32
  }
  func.func @transform_3(%arg0: i32) -> (i32, i32) {
    %c0_i32 = arith.constant 0 : i32
    %c0_i32_0 = arith.constant 0 : i32
    %c0_i32_1 = arith.constant 0 : i32
    return %c0_i32, %c0_i32_0 : i32, i32
  }
  func.func @transform_4(%arg0: i32) -> (i32, i32) {
    %c0_i32 = arith.constant 0 : i32
    %c0_i32_0 = arith.constant 0 : i32
    %c0_i32_1 = arith.constant 0 : i32
    return %c0_i32, %c0_i32_0 : i32, i32
  }
  func.func @transform_5(%arg0: i32) -> (i32, i32) {
    %c0_i32 = arith.constant 0 : i32
    %c0_i32_0 = arith.constant 0 : i32
    %c0_i32_1 = arith.constant 0 : i32
    return %c0_i32, %c0_i32_0 : i32, i32
  }
  func.func @transform_6(%arg0: i32) -> (i32, i32) {
    %c0_i32 = arith.constant 0 : i32
    %c0_i32_0 = arith.constant 0 : i32
    %c0_i32_1 = arith.constant 0 : i32
    return %c0_i32, %c0_i32_0 : i32, i32
  }
  func.func @transform_7(%arg0: i32) -> (i32, i32) {
    %c0_i32 = arith.constant 0 : i32
    %c0_i32_0 = arith.constant 0 : i32
    %c0_i32_1 = arith.constant 0 : i32
    return %c0_i32, %c0_i32_0 : i32, i32
  }
  func.func @transform_8(%arg0: i32) -> (i32, i32) {
    %c0_i32 = arith.constant 0 : i32
    %c0_i32_0 = arith.constant 0 : i32
    %c0_i32_1 = arith.constant 0 : i32
    return %c0_i32, %c0_i32_0 : i32, i32
  }
  func.func @transform_9(%arg0: i32) -> (i32, i32) {
    %c0_i32 = arith.constant 0 : i32
    %c0_i32_0 = arith.constant 0 : i32
    return %arg0, %c0_i32 : i32, i32
  }
  func.func @transform_10(%arg0: i32) -> (i32, i32) {
    %c0_i32 = arith.constant 0 : i32
    %c0_i32_0 = arith.constant 0 : i32
    return %arg0, %c0_i32 : i32, i32
  }
}

</mosaic_0001>

<llo_original>
// kernel: text_autoencoder_forward.1
$region0: #{text_autoencoder_forward.1}
  #allocation0 [shape = 'u32[]', space=smem, size = 0x4, offset = 0x4, fixed_abs, tag = 'smem constant byte address 0x4 - core index']
  #allocation1 [shape = 'u32[144,128]{1,0:T(1,128)}', space=vmem, size = 0x12000, scoped, tag = 'internal scratch']
  %s0 = inlined_call_operand.hbm [shape: f32[8,128], index: 0, kind: input, shape index: {}]
  %s1 = inlined_call_operand.hbm [shape: bf16[128,128], index: 1, kind: input, shape index: {}]
  %s2 = inlined_call_operand.hbm [shape: bf16[128,128], index: 2, kind: input, shape index: {}]
  %s3 = inlined_call_operand.hbm [shape: bf16[128,128], index: 3, kind: input, shape index: {}]
  %s4 = inlined_call_operand.hbm [shape: bf16[128,128], index: 4, kind: input, shape index: {}]
  %s5 = inlined_call_operand.vmem [shape: f32[1,128], index: 5, kind: input, shape index: {}]
  %s6 = inlined_call_operand.vmem [shape: f32[1,128], index: 6, kind: input, shape index: {}]
  %s7 = inlined_call_operand.vmem [shape: f32[1,128], index: 7, kind: input, shape index: {}]
  %s8 = inlined_call_operand.vmem [shape: f32[1,128], index: 8, kind: input, shape index: {}]
  %s9 = inlined_call_operand.hbm [shape: f32[8,128], index: 9, kind: output, shape index: {0}]
  %s10 = inlined_call_operand.hbm [shape: f32[8,128], index: 10, kind: output, shape index: {1}]
  %11 = xla_tuple %s9, %s10
  %s12 = sld [smem:[#allocation0]]
  $region74: #{text_autoencoder_forward.1} parent=0
    _
  %s14 = ssub.s32 1, %s12
  %s15 = scalar_select 0, %s14, %s12
  $region1: #{text_autoencoder_forward.1} parent=0
    #allocation2 [shape = 'u8[4096]{0}', space=vmem, size = 0x1000, scoped, tag = 'input window, operand 0, single buffered']
    #allocation3 [shape = 's32[1]{0}', space=sflag, size = 0x4, scoped, tag = 'scoped memory for text_autoencoder_forward.1']
    #allocation4 [shape = 's32[1]{0}', space=sflag, size = 0x4, scoped, tag = 'scoped memory for text_autoencoder_forward.1']
    #allocation5 [shape = 'u8[32768]{0}', space=vmem, size = 0x8000, scoped, tag = 'input window, operand 1, single buffered']
    #allocation6 [shape = 's32[1]{0}', space=sflag, size = 0x4, scoped, tag = 'scoped memory for text_autoencoder_forward.1']
    #allocation7 [shape = 'u8[32768]{0}', space=vmem, size = 0x8000, scoped, tag = 'input window, operand 2, single buffered']
    #allocation8 [shape = 'u8[32768]{0}', space=vmem, size = 0x8000, scoped, tag = 'input window, operand 3, single buffered']
    #allocation9 [shape = 's32[1]{0}', space=sflag, size = 0x4, scoped, tag = 'scoped memory for text_autoencoder_forward.1']
    #allocation10 [shape = 'u8[32768]{0}', space=vmem, size = 0x8000, scoped, tag = 'input window, operand 4, single buffered']
    #allocation11 [shape = 'u8[4096]{0}', space=vmem, size = 0x1000, scoped, tag = 'output window, operand 0, single buffered']
    #allocation12 [shape = 'u8[4096]{0}', space=vmem, size = 0x1000, scoped, tag = 'output window, operand 1, single buffered']
    #allocation13 [shape = 's32[1]{0}', space=sflag, size = 0x4, scoped, tag = 'scoped memory for text_autoencoder_forward.1']
    %16 = vsyncpa [#allocation3], 0
    %17 = vsyncpa [#allocation6], 0
    %18 = vsyncpa [#allocation9], 0
    %19 = vsyncpa [#allocation4], 0
    %20 = vsyncpa [#allocation13], 0
    // Predicated region
    $region2: #{text_autoencoder_forward.1} parent=1 // pred_check
      _
    $region3: #{text_autoencoder_forward.1} parent=1 // pred_check_branch
      %22 = sbr.rel (0) target = $region5
    $region4: #{text_autoencoder_forward.1} parent=1 // pred_region
      %s24 = ssub.s32 128, 128
      %25 = vsyncadd [#allocation3], %s24
      %s27 = sshll.u32 [#allocation2], 4
      %s28 = int_to_ptr.vmem [resolvable:$true] %s27
      %30 = dma.hbm_to_vmem [thread:$0]  %s0, 128, %s28, [#allocation3]
    $region5: #{text_autoencoder_forward.1} parent=1 // pred_fallthru
      _
    // Predicated region
    $region6: #{text_autoencoder_forward.1} parent=1 // pred_check
      _
    $region7: #{text_autoencoder_forward.1} parent=1 // pred_check_branch
      %32 = sbr.rel (0) target = $region9
    $region8: #{text_autoencoder_forward.1} parent=1 // pred_region
      %s34 = ssub.s32 1024, 1024
      %35 = vsyncadd [#allocation6], %s34
      %s36 = sshll.u32 [#allocation5], 4
      %s37 = int_to_ptr.vmem [resolvable:$true] %s36
      %42 = dma.hbm_to_vmem [thread:$0]  %s1, 1024, %s37, [#allocation6], 64, 64, 4
    $region9: #{text_autoencoder_forward.1} parent=1 // pred_fallthru
      _
    // Predicated region
    $region10: #{text_autoencoder_forward.1} parent=1 // pred_check
      _
    $region11: #{text_autoencoder_forward.1} parent=1 // pred_check_branch
      %44 = sbr.rel (0) target = $region13
    $region12: #{text_autoencoder_forward.1} parent=1 // pred_region
      %s46 = ssub.s32 1024, 1024
      %47 = vsyncadd [#allocation6], %s46
      %s48 = sshll.u32 [#allocation7], 4
      %s49 = int_to_ptr.vmem [resolvable:$true] %s48
      %54 = dma.hbm_to_vmem [thread:$0]  %s2, 1024, %s49, [#allocation6], 64, 64, 4
    $region13: #{text_autoencoder_forward.1} parent=1 // pred_fallthru
      _
    // Predicated region
    $region14: #{text_autoencoder_forward.1} parent=1 // pred_check
      _
    $region15: #{text_autoencoder_forward.1} parent=1 // pred_check_branch
      %56 = sbr.rel (0) target = $region17
    $region16: #{text_autoencoder_forward.1} parent=1 // pred_region
      %s58 = ssub.s32 1024, 1024
      %59 = vsyncadd [#allocation9], %s58
      %s60 = sshll.u32 [#allocation8], 4
      %s61 = int_to_ptr.vmem [resolvable:$true] %s60
      %66 = dma.hbm_to_vmem [thread:$0]  %s3, 1024, %s61, [#allocation9], 64, 64, 4
    $region17: #{text_autoencoder_forward.1} parent=1 // pred_fallthru
      _
    // Predicated region
    $region18: #{text_autoencoder_forward.1} parent=1 // pred_check
      _
    $region19: #{text_autoencoder_forward.1} parent=1 // pred_check_branch
      %68 = sbr.rel (0) target = $region21
    $region20: #{text_autoencoder_forward.1} parent=1 // pred_region
      %s70 = ssub.s32 1024, 1024
      %71 = vsyncadd [#allocation9], %s70
      %s72 = sshll.u32 [#allocation10], 4
      %s73 = int_to_ptr.vmem [resolvable:$true] %s72
      %78 = dma.hbm_to_vmem [thread:$0]  %s4, 1024, %s73, [#allocation9], 64, 64, 4
    $region21: #{text_autoencoder_forward.1} parent=1 // pred_fallthru
      _
    // Predicated region
    $region22: #{text_autoencoder_forward.1} parent=1 // pred_check
      _
    $region23: #{text_autoencoder_forward.1} parent=1 // pred_check_branch
      %80 = sbr.rel (0) target = $region25
    $region24: #{text_autoencoder_forward.1} parent=1 // pred_region
      _
    $region25: #{text_autoencoder_forward.1} parent=1 // pred_fallthru
      _
    // Predicated region
    $region26: #{text_autoencoder_forward.1} parent=1 // pred_check
      _
    $region27: #{text_autoencoder_forward.1} parent=1 // pred_check_branch
      %82 = sbr.rel (0) target = $region29
    $region28: #{text_autoencoder_forward.1} parent=1 // pred_region
      _
    $region29: #{text_autoencoder_forward.1} parent=1 // pred_fallthru
      _
    // Predicated region
    $region30: #{text_autoencoder_forward.1} parent=1 // pred_check
      _
    $region31: #{text_autoencoder_forward.1} parent=1 // pred_check_branch
      %84 = sbr.rel (0) target = $region33
    $region32: #{text_autoencoder_forward.1} parent=1 // pred_region
      _
    $region33: #{text_autoencoder_forward.1} parent=1 // pred_fallthru
      _
    // Predicated region
    $region34: #{text_autoencoder_forward.1} parent=1 // pred_check
      _
    $region35: #{text_autoencoder_forward.1} parent=1 // pred_check_branch
      %86 = sbr.rel (0) target = $region37
    $region36: #{text_autoencoder_forward.1} parent=1 // pred_region
      _
    $region37: #{text_autoencoder_forward.1} parent=1 // pred_fallthru
      _
    // Predicated region
    $region38: #{text_autoencoder_forward.1} parent=1 // pred_check
      _
    $region39: #{text_autoencoder_forward.1} parent=1 // pred_check_branch
      %88 = sbr.rel (0) target = $region41
    $region40: #{text_autoencoder_forward.1} parent=1 // pred_region
      %89 = dma.done [#allocation3], 128
    $region41: #{text_autoencoder_forward.1} parent=1 // pred_fallthru
      _
    // Predicated region
    $region42: #{text_autoencoder_forward.1} parent=1 // pred_check
      _
    $region43: #{text_autoencoder_forward.1} parent=1 // pred_check_branch
      %91 = sbr.rel (0) target = $region45
    $region44: #{text_autoencoder_forward.1} parent=1 // pred_region
      %92 = dma.done [#allocation6], 1024
    $region45: #{text_autoencoder_forward.1} parent=1 // pred_fallthru
      _
    // Predicated region
    $region46: #{text_autoencoder_forward.1} parent=1 // pred_check
      _
    $region47: #{text_autoencoder_forward.1} parent=1 // pred_check_branch
      %94 = sbr.rel (0) target = $region49
    $region48: #{text_autoencoder_forward.1} parent=1 // pred_region
      %95 = dma.done [#allocation6], 1024
    $region49: #{text_autoencoder_forward.1} parent=1 // pred_fallthru
      _
    // Predicated region
    $region50: #{text_autoencoder_forward.1} parent=1 // pred_check
      _
    $region51: #{text_autoencoder_forward.1} parent=1 // pred_check_branch
      %97 = sbr.rel (0) target = $region53
    $region52: #{text_autoencoder_forward.1} parent=1 // pred_region
      %98 = dma.done [#allocation9], 1024
    $region53: #{text_autoencoder_forward.1} parent=1 // pred_fallthru
      _
    // Predicated region
    $region54: #{text_autoencoder_forward.1} parent=1 // pred_check
      _
    $region55: #{text_autoencoder_forward.1} parent=1 // pred_check_branch
      %100 = sbr.rel (0) target = $region57
    $region56: #{text_autoencoder_forward.1} parent=1 // pred_region
      %101 = dma.done [#allocation9], 1024
    $region57: #{text_autoencoder_forward.1} parent=1 // pred_fallthru
      _
    %v103 = vld [vmem:[#allocation2] sm:$0xff]
    %v104 = vpack.c.bf16 %v103, %v103
    %v105 = vld [vmem:[#allocation5] sm:$0xf]
    %v106 = vld [vmem:[#allocation5 + $0x4] sm:$0xf]
    %v107 = vld [vmem:[#allocation5 + $0x8] sm:$0xf]
    %v108 = vld [vmem:[#allocation5 + $0xc] sm:$0xf]
    %v109 = vld [vmem:[#allocation5 + $0x10] sm:$0xf]
    %v110 = vld [vmem:[#allocation5 + $0x14] sm:$0xf]
    %v111 = vld [vmem:[#allocation5 + $0x18] sm:$0xf]
    %v112 = vld [vmem:[#allocation5 + $0x1c] sm:$0xf]
    %v113 = vld [vmem:[#allocation5 + $0x20] sm:$0xf]
    %v114 = vld [vmem:[#allocation5 + $0x24] sm:$0xf]
    %v115 = vld [vmem:[#allocation5 + $0x28] sm:$0xf]
    %v116 = vld [vmem:[#allocation5 + $0x2c] sm:$0xf]
    %v117 = vld [vmem:[#allocation5 + $0x30] sm:$0xf]
    %v118 = vld [vmem:[#allocation5 + $0x34] sm:$0xf]
    %v119 = vld [vmem:[#allocation5 + $0x38] sm:$0xf]
    %v120 = vld [vmem:[#allocation5 + $0x3c] sm:$0xf]
    %v121 = vld [vmem:[%s5] sm:$0x1]
    %v123 = vlaneseq
    %v124 = vshrl.u32 %v123, 7
    %v125 = vsub.s32 0, %v124
    %v126 = vrot.slane %v121, %v125
    %v144 = vunpack.c.l.b16 %v105
    %v145 = vunpack.c.l.b16 %v106
    %v146 = vunpack.c.l.b16 %v107
    %v147 = vunpack.c.l.b16 %v108
    %v148 = vunpack.c.l.b16 %v109
    %v149 = vunpack.c.l.b16 %v110
    %v150 = vunpack.c.l.b16 %v111
    %v151 = vunpack.c.l.b16 %v112
    %v152 = vunpack.c.l.b16 %v113
    %v153 = vunpack.c.l.b16 %v114
    %v154 = vunpack.c.l.b16 %v115
    %v155 = vunpack.c.l.b16 %v116
    %v156 = vunpack.c.l.b16 %v117
    %v157 = vunpack.c.l.b16 %v118
    %v158 = vunpack.c.l.b16 %v119
    %v159 = vunpack.c.l.b16 %v120
    %v160 = vpack.c.b16 %v145, %v144
    %v161 = vpack.c.b16 %v147, %v146
    %v162 = vpack.c.b16 %v149, %v148
    %v163 = vpack.c.b16 %v151, %v150
    %v164 = vpack.c.b16 %v153, %v152
    %v165 = vpack.c.b16 %v155, %v154
    %v166 = vpack.c.b16 %v157, %v156
    %v167 = vpack.c.b16 %v159, %v158
    %176 = vmatprep.subr.bf16.mxu0 0
    %177 = vmatpush1.bf16.msra.mxu0 %v167
    %178 = vmatprep.subr.bf16.mxu0 0
    %179 = vmatpush1.bf16.msra.mxu0 %v166
    %180 = vmatprep.subr.bf16.mxu0 0
    %181 = vmatpush1.bf16.msra.mxu0 %v165
    %182 = vmatprep.subr.bf16.mxu0 0
    %183 = vmatpush1.bf16.msra.mxu0 %v164
    %184 = vmatprep.subr.bf16.mxu0 0
    %185 = vmatpush1.bf16.msra.mxu0 %v163
    %186 = vmatprep.subr.bf16.mxu0 0
    %187 = vmatpush1.bf16.msra.mxu0 %v162
    %188 = vmatprep.subr.bf16.mxu0 0
    %189 = vmatpush1.bf16.msra.mxu0 %v161
    %190 = vmatprep.subr.bf16.mxu0 0
    %191 = vmatpush1.bf16.msra.mxu0 %v160
    %192 = vmatprep.subr.bf16.mxu0 0
    %193 = vmatpush2.bf16.msra.mxu0 0
    %194 = vmatprep.subr.bf16.mxu0 0
    %195 = vmatpush2.bf16.msra.mxu0 0
    %196 = vmatprep.subr.bf16.mxu0 0
    %197 = vmatpush2.bf16.msra.mxu0 0
    %198 = vmatprep.subr.bf16.mxu0 0
    %199 = vmatpush2.bf16.msra.mxu0 0
    %200 = vmatprep.subr.bf16.mxu0 0
    %201 = vmatpush2.bf16.msra.mxu0 0
    %202 = vmatprep.subr.bf16.mxu0 0
    %203 = vmatpush2.bf16.msra.mxu0 0
    %204 = vmatprep.subr.bf16.mxu0 0
    %205 = vmatpush2.bf16.msra.mxu0 0
    %206 = vmatprep.subr.bf16.mxu0 0
    %207 = vmatpush2.bf16.msra.mxu0 0
    %208 = vmatprep.mubr.bf16.mxu0 0
    %209 = vmatmul.mubr.bf16.gmra.mxu0 %v104
    %v210 = vpop.f32.mrf.mxu0
    %v211 = vadd.f32 %v126, %v210
    %v212 = vpop.f32.mrf.mxu0
    %v213 = vpop.f32.mrf.mxu0
    %v214 = vpop.f32.mrf.mxu0
    %215 = vdwg.mxu0
    %v216 = vmax.f32 %v211, 0.0
    %v217 = vpack.c.bf16 %v216, %v216
    %v218 = vld [vmem:[#allocation7] sm:$0xf]
    %v219 = vld [vmem:[#allocation7 + $0x4] sm:$0xf]
    %v220 = vld [vmem:[#allocation7 + $0x8] sm:$0xf]
    %v221 = vld [vmem:[#allocation7 + $0xc] sm:$0xf]
    %v222 = vld [vmem:[#allocation7 + $0x10] sm:$0xf]
    %v223 = vld [vmem:[#allocation7 + $0x14] sm:$0xf]
    %v224 = vld [vmem:[#allocation7 + $0x18] sm:$0xf]
    %v225 = vld [vmem:[#allocation7 + $0x1c] sm:$0xf]
    %v226 = vld [vmem:[#allocation7 + $0x20] sm:$0xf]
    %v227 = vld [vmem:[#allocation7 + $0x24] sm:$0xf]
    %v228 = vld [vmem:[#allocation7 + $0x28] sm:$0xf]
    %v229 = vld [vmem:[#allocation7 + $0x2c] sm:$0xf]
    %v230 = vld [vmem:[#allocation7 + $0x30] sm:$0xf]
    %v231 = vld [vmem:[#allocation7 + $0x34] sm:$0xf]
    %v232 = vld [vmem:[#allocation7 + $0x38] sm:$0xf]
    %v233 = vld [vmem:[#allocation7 + $0x3c] sm:$0xf]
    %v234 = vld [vmem:[%s6] sm:$0x1]
    %v236 = vlaneseq
    %v237 = vshrl.u32 %v236, 7
    %v238 = vsub.s32 0, %v237
    %v239 = vrot.slane %v234, %v238
    %v257 = vunpack.c.l.b16 %v218
    %v258 = vunpack.c.l.b16 %v219
    %v259 = vunpack.c.l.b16 %v220
    %v260 = vunpack.c.l.b16 %v221
    %v261 = vunpack.c.l.b16 %v222
    %v262 = vunpack.c.l.b16 %v223
    %v263 = vunpack.c.l.b16 %v224
    %v264 = vunpack.c.l.b16 %v225
    %v265 = vunpack.c.l.b16 %v226
    %v266 = vunpack.c.l.b16 %v227
    %v267 = vunpack.c.l.b16 %v228
    %v268 = vunpack.c.l.b16 %v229
    %v269 = vunpack.c.l.b16 %v230
    %v270 = vunpack.c.l.b16 %v231
    %v271 = vunpack.c.l.b16 %v232
    %v272 = vunpack.c.l.b16 %v233
    %v273 = vpack.c.b16 %v258, %v257
    %v274 = vpack.c.b16 %v260, %v259
    %v275 = vpack.c.b16 %v262, %v261
    %v276 = vpack.c.b16 %v264, %v263
    %v277 = vpack.c.b16 %v266, %v265
    %v278 = vpack.c.b16 %v268, %v267
    %v279 = vpack.c.b16 %v270, %v269
    %v280 = vpack.c.b16 %v272, %v271
    %289 = vmatprep.subr.bf16.mxu0 0
    %290 = vmatpush1.bf16.msra.mxu0 %v280
    %291 = vmatprep.subr.bf16.mxu0 0
    %292 = vmatpush1.bf16.msra.mxu0 %v279
    %293 = vmatprep.subr.bf16.mxu0 0
    %294 = vmatpush1.bf16.msra.mxu0 %v278
    %295 = vmatprep.subr.bf16.mxu0 0
    %296 = vmatpush1.bf16.msra.mxu0 %v277
    %297 = vmatprep.subr.bf16.mxu0 0
    %298 = vmatpush1.bf16.msra.mxu0 %v276
    %299 = vmatprep.subr.bf16.mxu0 0
    %300 = vmatpush1.bf16.msra.mxu0 %v275
    %301 = vmatprep.subr.bf16.mxu0 0
    %302 = vmatpush1.bf16.msra.mxu0 %v274
    %303 = vmatprep.subr.bf16.mxu0 0
    %304 = vmatpush1.bf16.msra.mxu0 %v273
    %305 = vmatprep.subr.bf16.mxu0 0
    %306 = vmatpush2.bf16.msra.mxu0 0
    %307 = vmatprep.subr.bf16.mxu0 0
    %308 = vmatpush2.bf16.msra.mxu0 0
    %309 = vmatprep.subr.bf16.mxu0 0
    %310 = vmatpush2.bf16.msra.mxu0 0
    %311 = vmatprep.subr.bf16.mxu0 0
    %312 = vmatpush2.bf16.msra.mxu0 0
    %313 = vmatprep.subr.bf16.mxu0 0
    %314 = vmatpush2.bf16.msra.mxu0 0
    %315 = vmatprep.subr.bf16.mxu0 0
    %316 = vmatpush2.bf16.msra.mxu0 0
    %317 = vmatprep.subr.bf16.mxu0 0
    %318 = vmatpush2.bf16.msra.mxu0 0
    %319 = vmatprep.subr.bf16.mxu0 0
    %320 = vmatpush2.bf16.msra.mxu0 0
    %321 = vmatprep.mubr.bf16.mxu0 0
    %322 = vmatmul.mubr.bf16.gmra.mxu0 %v217
    %v323 = vpop.f32.mrf.mxu0
    %v324 = vadd.f32 %v239, %v323
    %v325 = vpop.f32.mrf.mxu0
    %v326 = vpop.f32.mrf.mxu0
    %v327 = vpop.f32.mrf.mxu0
    %328 = vdwg.mxu0
    %v329 = vmax.f32 %v324, 0.0
    %330 = vst [vmem:[#allocation11] sm:$0xff] %v329
    %v331 = vpack.c.bf16 %v329, %v329
    %v332 = vld [vmem:[#allocation8] sm:$0xf]
    %v333 = vld [vmem:[#allocation8 + $0x4] sm:$0xf]
    %v334 = vld [vmem:[#allocation8 + $0x8] sm:$0xf]
    %v335 = vld [vmem:[#allocation8 + $0xc] sm:$0xf]
    %v336 = vld [vmem:[#allocation8 + $0x10] sm:$0xf]
    %v337 = vld [vmem:[#allocation8 + $0x14] sm:$0xf]
    %v338 = vld [vmem:[#allocation8 + $0x18] sm:$0xf]
    %v339 = vld [vmem:[#allocation8 + $0x1c] sm:$0xf]
    %v340 = vld [vmem:[#allocation8 + $0x20] sm:$0xf]
    %v341 = vld [vmem:[#allocation8 + $0x24] sm:$0xf]
    %v342 = vld [vmem:[#allocation8 + $0x28] sm:$0xf]
    %v343 = vld [vmem:[#allocation8 + $0x2c] sm:$0xf]
    %v344 = vld [vmem:[#allocation8 + $0x30] sm:$0xf]
    %v345 = vld [vmem:[#allocation8 + $0x34] sm:$0xf]
    %v346 = vld [vmem:[#allocation8 + $0x38] sm:$0xf]
    %v347 = vld [vmem:[#allocation8 + $0x3c] sm:$0xf]
    %v348 = vld [vmem:[%s7] sm:$0x1]
    %v350 = vlaneseq
    %v351 = vshrl.u32 %v350, 7
    %v352 = vsub.s32 0, %v351
    %v353 = vrot.slane %v348, %v352
    %v371 = vunpack.c.l.b16 %v332
    %v372 = vunpack.c.l.b16 %v333
    %v373 = vunpack.c.l.b16 %v334
    %v374 = vunpack.c.l.b16 %v335
    %v375 = vunpack.c.l.b16 %v336
    %v376 = vunpack.c.l.b16 %v337
    %v377 = vunpack.c.l.b16 %v338
    %v378 = vunpack.c.l.b16 %v339
    %v379 = vunpack.c.l.b16 %v340
    %v380 = vunpack.c.l.b16 %v341
    %v381 = vunpack.c.l.b16 %v342
    %v382 = vunpack.c.l.b16 %v343
    %v383 = vunpack.c.l.b16 %v344
    %v384 = vunpack.c.l.b16 %v345
    %v385 = vunpack.c.l.b16 %v346
    %v386 = vunpack.c.l.b16 %v347
    %v387 = vpack.c.b16 %v372, %v371
    %v388 = vpack.c.b16 %v374, %v373
    %v389 = vpack.c.b16 %v376, %v375
    %v390 = vpack.c.b16 %v378, %v377
    %v391 = vpack.c.b16 %v380, %v379
    %v392 = vpack.c.b16 %v382, %v381
    %v393 = vpack.c.b16 %v384, %v383
    %v394 = vpack.c.b16 %v386, %v385
    %403 = vmatprep.subr.bf16.mxu0 0
    %404 = vmatpush1.bf16.msra.mxu0 %v394
    %405 = vmatprep.subr.bf16.mxu0 0
    %406 = vmatpush1.bf16.msra.mxu0 %v393
    %407 = vmatprep.subr.bf16.mxu0 0
    %408 = vmatpush1.bf16.msra.mxu0 %v392
    %409 = vmatprep.subr.bf16.mxu0 0
    %410 = vmatpush1.bf16.msra.mxu0 %v391
    %411 = vmatprep.subr.bf16.mxu0 0
    %412 = vmatpush1.bf16.msra.mxu0 %v390
    %413 = vmatprep.subr.bf16.mxu0 0
    %414 = vmatpush1.bf16.msra.mxu0 %v389
    %415 = vmatprep.subr.bf16.mxu0 0
    %416 = vmatpush1.bf16.msra.mxu0 %v388
    %417 = vmatprep.subr.bf16.mxu0 0
    %418 = vmatpush1.bf16.msra.mxu0 %v387
    %419 = vmatprep.subr.bf16.mxu0 0
    %420 = vmatpush2.bf16.msra.mxu0 0
    %421 = vmatprep.subr.bf16.mxu0 0
    %422 = vmatpush2.bf16.msra.mxu0 0
    %423 = vmatprep.subr.bf16.mxu0 0
    %424 = vmatpush2.bf16.msra.mxu0 0
    %425 = vmatprep.subr.bf16.mxu0 0
    %426 = vmatpush2.bf16.msra.mxu0 0
    %427 = vmatprep.subr.bf16.mxu0 0
    %428 = vmatpush2.bf16.msra.mxu0 0
    %429 = vmatprep.subr.bf16.mxu0 0
    %430 = vmatpush2.bf16.msra.mxu0 0
    %431 = vmatprep.subr.bf16.mxu0 0
    %432 = vmatpush2.bf16.msra.mxu0 0
    %433 = vmatprep.subr.bf16.mxu0 0
    %434 = vmatpush2.bf16.msra.mxu0 0
    %435 = vmatprep.mubr.bf16.mxu0 0
    %436 = vmatmul.mubr.bf16.gmra.mxu0 %v331
    %v437 = vpop.f32.mrf.mxu0
    %v438 = vadd.f32 %v353, %v437
    %v439 = vpop.f32.mrf.mxu0
    %v440 = vpop.f32.mrf.mxu0
    %v441 = vpop.f32.mrf.mxu0
    %442 = vdwg.mxu0
    %v443 = vmax.f32 %v438, 0.0
    %v444 = vpack.c.bf16 %v443, %v443
    %v445 = vld [vmem:[#allocation10] sm:$0xf]
    %v446 = vld [vmem:[#allocation10 + $0x4] sm:$0xf]
    %v447 = vld [vmem:[#allocation10 + $0x8] sm:$0xf]
    %v448 = vld [vmem:[#allocation10 + $0xc] sm:$0xf]
    %v449 = vld [vmem:[#allocation10 + $0x10] sm:$0xf]
    %v450 = vld [vmem:[#allocation10 + $0x14] sm:$0xf]
    %v451 = vld [vmem:[#allocation10 + $0x18] sm:$0xf]
    %v452 = vld [vmem:[#allocation10 + $0x1c] sm:$0xf]
    %v453 = vld [vmem:[#allocation10 + $0x20] sm:$0xf]
    %v454 = vld [vmem:[#allocation10 + $0x24] sm:$0xf]
    %v455 = vld [vmem:[#allocation10 + $0x28] sm:$0xf]
    %v456 = vld [vmem:[#allocation10 + $0x2c] sm:$0xf]
    %v457 = vld [vmem:[#allocation10 + $0x30] sm:$0xf]
    %v458 = vld [vmem:[#allocation10 + $0x34] sm:$0xf]
    %v459 = vld [vmem:[#allocation10 + $0x38] sm:$0xf]
    %v460 = vld [vmem:[#allocation10 + $0x3c] sm:$0xf]
    %v461 = vld [vmem:[%s8] sm:$0x1]
    %v463 = vlaneseq
    %v464 = vshrl.u32 %v463, 7
    %v465 = vsub.s32 0, %v464
    %v466 = vrot.slane %v461, %v465
    %v484 = vunpack.c.l.b16 %v445
    %v485 = vunpack.c.l.b16 %v446
    %v486 = vunpack.c.l.b16 %v447
    %v487 = vunpack.c.l.b16 %v448
    %v488 = vunpack.c.l.b16 %v449
    %v489 = vunpack.c.l.b16 %v450
    %v490 = vunpack.c.l.b16 %v451
    %v491 = vunpack.c.l.b16 %v452
    %v492 = vunpack.c.l.b16 %v453
    %v493 = vunpack.c.l.b16 %v454
    %v494 = vunpack.c.l.b16 %v455
    %v495 = vunpack.c.l.b16 %v456
    %v496 = vunpack.c.l.b16 %v457
    %v497 = vunpack.c.l.b16 %v458
    %v498 = vunpack.c.l.b16 %v459
    %v499 = vunpack.c.l.b16 %v460
    %v500 = vpack.c.b16 %v485, %v484
    %v501 = vpack.c.b16 %v487, %v486
    %v502 = vpack.c.b16 %v489, %v488
    %v503 = vpack.c.b16 %v491, %v490
    %v504 = vpack.c.b16 %v493, %v492
    %v505 = vpack.c.b16 %v495, %v494
    %v506 = vpack.c.b16 %v497, %v496
    %v507 = vpack.c.b16 %v499, %v498
    %516 = vmatprep.subr.bf16.mxu0 0
    %517 = vmatpush1.bf16.msra.mxu0 %v507
    %518 = vmatprep.subr.bf16.mxu0 0
    %519 = vmatpush1.bf16.msra.mxu0 %v506
    %520 = vmatprep.subr.bf16.mxu0 0
    %521 = vmatpush1.bf16.msra.mxu0 %v505
    %522 = vmatprep.subr.bf16.mxu0 0
    %523 = vmatpush1.bf16.msra.mxu0 %v504
    %524 = vmatprep.subr.bf16.mxu0 0
    %525 = vmatpush1.bf16.msra.mxu0 %v503
    %526 = vmatprep.subr.bf16.mxu0 0
    %527 = vmatpush1.bf16.msra.mxu0 %v502
    %528 = vmatprep.subr.bf16.mxu0 0
    %529 = vmatpush1.bf16.msra.mxu0 %v501
    %530 = vmatprep.subr.bf16.mxu0 0
    %531 = vmatpush1.bf16.msra.mxu0 %v500
    %532 = vmatprep.subr.bf16.mxu0 0
    %533 = vmatpush2.bf16.msra.mxu0 0
    %534 = vmatprep.subr.bf16.mxu0 0
    %535 = vmatpush2.bf16.msra.mxu0 0
    %536 = vmatprep.subr.bf16.mxu0 0
    %537 = vmatpush2.bf16.msra.mxu0 0
    %538 = vmatprep.subr.bf16.mxu0 0
    %539 = vmatpush2.bf16.msra.mxu0 0
    %540 = vmatprep.subr.bf16.mxu0 0
    %541 = vmatpush2.bf16.msra.mxu0 0
    %542 = vmatprep.subr.bf16.mxu0 0
    %543 = vmatpush2.bf16.msra.mxu0 0
    %544 = vmatprep.subr.bf16.mxu0 0
    %545 = vmatpush2.bf16.msra.mxu0 0
    %546 = vmatprep.subr.bf16.mxu0 0
    %547 = vmatpush2.bf16.msra.mxu0 0
    %548 = vmatprep.mubr.bf16.mxu0 0
    %549 = vmatmul.mubr.bf16.gmra.mxu0 %v444
    %v550 = vpop.f32.mrf.mxu0
    %v551 = vadd.f32 %v466, %v550
    %v552 = vpop.f32.mrf.mxu0
    %v553 = vpop.f32.mrf.mxu0
    %v554 = vpop.f32.mrf.mxu0
    %555 = vdwg.mxu0
    %v556 = vmax.f32 %v551, 0.0
    %v557 = vxor.u32 %v556, 2147483648
    %v558 = vmul.f32 %v557, 1.442695
    %v559 = vpow.pop %v558
    %v560 = vadd.f32 %v559, 1.0
    %v561 = vrcp.pop %v560
    %v562 = vmul.f32 1.0, %v561
    %v563 = vlaneseq
    %v564 = vand.u32 %v563, 127
    %vm565 = vcmp.lt.s32.totalorder %v564, 32
    %v566 = vsel %vm565, %v562, 0.0
    %567 = vst [vmem:[#allocation12] sm:$0xff] %v566
    // Predicated region
    $region58: #{text_autoencoder_forward.1} parent=1 // pred_check
      _
    $region59: #{text_autoencoder_forward.1} parent=1 // pred_check_branch
      %569 = sbr.rel (0) target = $region61
    $region60: #{text_autoencoder_forward.1} parent=1 // pred_region
      %s571 = ssub.s32 128, 128
      %572 = vsyncadd [#allocation4], %s571
      %s574 = sshll.u32 [#allocation11], 4
      %s575 = int_to_ptr.vmem [resolvable:$true] %s574
      %577 = dma.vmem_to_hbm [thread:$0]  %s575, 128, %s9, [#allocation4]
    $region61: #{text_autoencoder_forward.1} parent=1 // pred_fallthru
      _
    // Predicated region
    $region62: #{text_autoencoder_forward.1} parent=1 // pred_check
      _
    $region63: #{text_autoencoder_forward.1} parent=1 // pred_check_branch
      %579 = sbr.rel (0) target = $region65
    $region64: #{text_autoencoder_forward.1} parent=1 // pred_region
      %s581 = ssub.s32 128, 128
      %582 = vsyncadd [#allocation13], %s581
      %s584 = sshll.u32 [#allocation12], 4
      %s585 = int_to_ptr.vmem [resolvable:$true] %s584
      %587 = dma.vmem_to_hbm [thread:$0]  %s585, 128, %s10, [#allocation13]
    $region65: #{text_autoencoder_forward.1} parent=1 // pred_fallthru
      _
    // Predicated region
    $region66: #{text_autoencoder_forward.1} parent=1 // pred_check
      _
    $region67: #{text_autoencoder_forward.1} parent=1 // pred_check_branch
      %589 = sbr.rel (0) target = $region69
    $region68: #{text_autoencoder_forward.1} parent=1 // pred_region
      %590 = dma.done [#allocation4], 128
    $region69: #{text_autoencoder_forward.1} parent=1 // pred_fallthru
      _
    // Predicated region
    $region70: #{text_autoencoder_forward.1} parent=1 // pred_check
      _
    $region71: #{text_autoencoder_forward.1} parent=1 // pred_check_branch
      %592 = sbr.rel (0) target = $region73
    $region72: #{text_autoencoder_forward.1} parent=1 // pred_region
      %593 = dma.done [#allocation13], 128
    $region73: #{text_autoencoder_forward.1} parent=1 // pred_fallthru
      _
    %594 = vsyncpa [#allocation3], 1
    %595 = vsyncpa [#allocation6], 1
    %596 = vsyncpa [#allocation9], 1
    %597 = vsyncpa [#allocation4], 1
    %598 = vsyncpa [#allocation13], 1

</llo_original>
